<compile_context>
chip_gen: v6e
topology: v6e:2x2x1
jax: 0.10.0
libtpu: 0.0.40
codegen_flags: <defaults>
</compile_context>

<pallas_src>
import jax
import jax.numpy as jnp
from jax.experimental import pallas as pl
from jax.experimental.pallas import tpu as pltpu


def highway_kernel(x_ref, w_ref, b_ref, o_ref):
    layer = pl.program_id(1)
    S = o_ref.shape[1]

    # Seed the resident carry (output block, constant across the layer axis)
    # with the incoming activation on the first layer of this batch tile.
    @pl.when(layer == 0)
    def _():
        o_ref[...] = x_ref[...].astype(jnp.float32)

    x = o_ref[...]                                            # [TB, S] f32

    # One fused MXU matmul: [TB, 2S] = x @ W_cat[layer]  (gate ‖ nonlinear).
    # bf16 inputs, f32 accumulation on the MXU.
    lin = jnp.dot(x.astype(jnp.bfloat16), w_ref[0],
                  preferred_element_type=jnp.float32) + b_ref[layer]

    gate = jax.nn.sigmoid(lin[:, :S])
    nonlin = jnp.maximum(lin[:, S:], 0.0)                     # f = ReLU

    # x <- gate*nonlin + (1-gate)*x, rewritten with one fewer multiply.
    o_ref[...] = x + gate * (nonlin - x)


def highway(x, w_cat, b_cat, *, batch_tile=None):
    """x: [B, S] float; w_cat: [L, S, 2S] (x @ W layout, gate cols then
    nonlinear cols), ideally bf16; b_cat: [L, 1, 2S] f32. Returns [B, S] f32."""
    B, S = x.shape
    L, S_in, twoS = w_cat.shape
    assert S_in == S and twoS == 2 * S
    assert b_cat.shape == (L, 1, 2 * S)

    # Batch tile: full batch for small B; otherwise 128-row tiles (MXU-sized)
    # when they divide B evenly (keeps the (8,128) block constraint trivially).
    tb = batch_tile or (B if B <= 128 or B % 128 != 0 else 128)
    if B % tb != 0:
        tb = B
    grid = (B // tb, L)

    # Rough resident-VMEM estimate: double-buffered weights + resident biases
    # + x input + output carry (double-buffered).
    w_bytes = S * 2 * S * w_cat.dtype.itemsize
    b_bytes = L * 2 * S * b_cat.dtype.itemsize
    act_bytes = tb * S * 4
    vmem_needed = 2 * w_bytes + b_bytes + 2 * act_bytes + 2 * act_bytes + (1 << 20)

    cp_kwargs = dict(dimension_semantics=("parallel", "arbitrary"))
    if vmem_needed > 32 * 1024 * 1024:
        cp_kwargs["vmem_limit_bytes"] = int(vmem_needed)

    return pl.pallas_call(
        highway_kernel,
        out_shape=jax.ShapeDtypeStruct((B, S), jnp.float32),
        grid_spec=pltpu.PrefetchScalarGridSpec(
            num_scalar_prefetch=0,
            grid=grid,
            in_specs=[
                # x: one tile per batch block, read only at layer 0.
                pl.BlockSpec((tb, S), lambda b, l: (b, 0)),
                # Fused weights: streamed per layer.
                pl.BlockSpec((1, S, 2 * S), lambda b, l: (l, 0, 0)),
                # All biases resident in VMEM (constant index map, tiny).
                pl.BlockSpec((L, 1, 2 * S), lambda b, l: (0, 0, 0)),
            ],
            # Output block is the resident f32 carry across the layer axis.
            out_specs=pl.BlockSpec((tb, S), lambda b, l: (b, 0)),
        ),
        compiler_params=pltpu.CompilerParams(**cp_kwargs),
    )(x, w_cat, b_cat)


def highway_ref(x, w_cat, b_cat):
    """Pure-JAX reference mirroring the PyTorch forward (and the kernel's
    bf16-weight numerics: inputs rounded to bf16, f32 accumulation)."""
    x = x.astype(jnp.float32)
    L, S, _ = w_cat.shape
    w = w_cat.astype(jnp.float32)
    b = b_cat.astype(jnp.float32)
    for l in range(L):
        xb = x.astype(jnp.bfloat16).astype(jnp.float32)
        lin = xb @ w[l] + b[l]
        gate = jax.nn.sigmoid(lin[:, :S])
        nonlin = jnp.maximum(lin[:, S:], 0.0)
        x = gate * nonlin + (1.0 - gate) * x
    return x


if __name__ == "__main__":
    batch = 8
    size = 128          # "size" in the PyTorch module
    num_layers = 3

    key = jax.random.PRNGKey(0)
    kx, kwg, kbg, kwn, kbn = jax.random.split(key, 5)

    # Deterministic synthetic parameters (nn.Linear-shaped: size -> size per
    # layer), already laid out for x @ W (i.e. PyTorch W^T).
    x = jax.random.normal(kx, (batch, size), dtype=jnp.float32)
    scale = 1.0 / jnp.sqrt(size)
    wg = jax.random.normal(kwg, (num_layers, size, size), dtype=jnp.float32) * scale
    bg = jax.random.normal(kbg, (num_layers, 1, size), dtype=jnp.float32) * scale
    wn = jax.random.normal(kwn, (num_layers, size, size), dtype=jnp.float32) * scale
    bn = jax.random.normal(kbn, (num_layers, 1, size), dtype=jnp.float32) * scale

    # Pack into the fused kernel layout: bf16 weights, f32 biases.
    w_cat = jnp.concatenate([wg, wn], axis=-1).astype(jnp.bfloat16)   # [L, S, 2S]
    b_cat = jnp.concatenate([bg, bn], axis=-1).astype(jnp.float32)    # [L, 1, 2S]

    out = highway(x, w_cat, b_cat)
    out = jax.block_until_ready(out)

    ref = highway_ref(x, w_cat, b_cat)
    assert out.shape == (batch, size)
    assert jnp.allclose(out, ref, atol=1e-3, rtol=1e-3), "mismatch vs reference"

    print("KERNEL_OK")
</pallas_src>

<mosaic_0001>
module attributes {stable_mosaic.version = 11 : i64} {
  func.func @highway_kernel(%arg0: i32, %arg1: i32, %arg2: memref<8x128xf32, #tpu.memory_space<vmem>>, %arg3: memref<1x128x256xbf16, #tpu.memory_space<vmem>>, %arg4: memref<3x1x256xf32, #tpu.memory_space<vmem>>, %arg5: memref<8x128xf32, #tpu.memory_space<vmem>>) attributes {dimension_semantics = [#tpu.dimension_semantics<parallel>, #tpu.dimension_semantics<arbitrary>], iteration_bounds = array<i64: 1, 3>, scalar_prefetch = 0 : i64, scratch_operands = 0 : i64, tpu.core_type = #tpu.core_type<tc>, window_params = [{transform_indices = @transform_0, window_bounds = array<i64: 8, 128>}, {transform_indices = @transform_1, window_bounds = array<i64: 1, 128, 256>}, {pipeline_mode = #tpu.pipeline_mode<synchronous>, transform_indices = @transform_2, window_bounds = array<i64: 3, 1, 256>}, {transform_indices = @transform_3, window_bounds = array<i64: 8, 128>}]} {
    %c0_i32 = arith.constant 0 : i32
    %0 = arith.cmpi eq, %arg1, %c0_i32 : i32
    %1 = arith.extui %0 : i1 to i32
    %c0_i32_0 = arith.constant 0 : i32
    %2 = arith.cmpi ne, %1, %c0_i32_0 : i32
    scf.if %2 {
      %c0_11 = arith.constant 0 : index
      %c0_12 = arith.constant 0 : index
      %26 = vector.load %arg2[%c0_11, %c0_12] : memref<8x128xf32, #tpu.memory_space<vmem>>, vector<8x128xf32>
      %c0_13 = arith.constant 0 : index
      %c0_14 = arith.constant 0 : index
      %27 = vector.load %arg5[%c0_13, %c0_14] : memref<8x128xf32, #tpu.memory_space<vmem>>, vector<8x128xf32>
      tpu.vector_store %arg5[%c0_13, %c0_14], %26 {strides = array<i32>} : memref<8x128xf32, #tpu.memory_space<vmem>>, vector<8x128xf32>,
    } else {
    }
    %c0 = arith.constant 0 : index
    %c0_1 = arith.constant 0 : index
    %3 = vector.load %arg5[%c0, %c0_1] : memref<8x128xf32, #tpu.memory_space<vmem>>, vector<8x128xf32>
    %4 = arith.truncf %3 : vector<8x128xf32> to vector<8x128xbf16>
    %c0_2 = arith.constant 0 : index
    %c0_3 = arith.constant 0 : index
    %c0_4 = arith.constant 0 : index
    %5 = vector.load %arg3[%c0_2, %c0_3, %c0_4] : memref<1x128x256xbf16, #tpu.memory_space<vmem>>, vector<1x128x256xbf16>
    %6 = vector.shape_cast %5 : vector<1x128x256xbf16> to vector<128x256xbf16>
    %cst = arith.constant dense<0.000000e+00> : vector<8x256xf32>
    %7 = tpu.matmul %4, %6, %cst {dimension_numbers = #tpu.dot_dimension_numbers<[1], [0], [0], [1], [0, 0, 1, 1], [], []>} : vector<8x128xbf16>, vector<128x256xbf16>, vector<8x256xf32> -> vector<8x256xf32>
    %8 = arith.index_cast %arg1 : i32 to index
    %c0_5 = arith.constant 0 : index
    %c0_6 = arith.constant 0 : index
    %9 = vector.load %arg4[%8, %c0_5, %c0_6] : memref<3x1x256xf32, #tpu.memory_space<vmem>>, vector<1x1x256xf32>
    %10 = vector.shape_cast %9 : vector<1x1x256xf32> to vector<1x256xf32>
    %11 = vector.broadcast %10 : vector<1x256xf32> to vector<8x256xf32>
    %12 = arith.addf %7, %11 : vector<8x256xf32>
    %13 = vector.extract_strided_slice %12 {offsets = [0, 0], sizes = [8, 128], strides = [1, 1]} : vector<8x256xf32> to vector<8x128xf32>
    %14 = arith.negf %13 : vector<8x128xf32>
    %15 = math.exp %14 : vector<8x128xf32>
    %cst_7 = arith.constant 1.000000e+00 : f32
    %16 = vector.broadcast %cst_7 : f32 to vector<8x128xf32>
    %17 = arith.addf %16, %15 : vector<8x128xf32>
    %18 = arith.divf %16, %17 : vector<8x128xf32>
    %19 = vector.extract_strided_slice %12 {offsets = [0, 128], sizes = [8, 128], strides = [1, 1]} : vector<8x256xf32> to vector<8x128xf32>
    %cst_8 = arith.constant 0.000000e+00 : f32
    %20 = vector.broadcast %cst_8 : f32 to vector<8x128xf32>
    %21 = arith.maximumf %19, %20 : vector<8x128xf32>
    %22 = arith.subf %21, %3 : vector<8x128xf32>
    %23 = arith.mulf %18, %22 : vector<8x128xf32>
    %24 = arith.addf %3, %23 : vector<8x128xf32>
    %c0_9 = arith.constant 0 : index
    %c0_10 = arith.constant 0 : index
    %25 = vector.load %arg5[%c0_9, %c0_10] : memref<8x128xf32, #tpu.memory_space<vmem>>, vector<8x128xf32>
    tpu.vector_store %arg5[%c0_9, %c0_10], %24 {strides = array<i32>} : memref<8x128xf32, #tpu.memory_space<vmem>>, vector<8x128xf32>,
    return
  }
  func.func @transform_0(%arg0: i32, %arg1: i32) -> (i32, i32) {
    %c0_i32 = arith.constant 0 : i32
    %c0_i32_0 = arith.constant 0 : i32
    return %arg0, %c0_i32 : i32, i32
  }
  func.func @transform_1(%arg0: i32, %arg1: i32) -> (i32, i32, i32) {
    %c0_i32 = arith.constant 0 : i32
    %c0_i32_0 = arith.constant 0 : i32
    %c0_i32_1 = arith.constant 0 : i32
    return %arg1, %c0_i32, %c0_i32_0 : i32, i32, i32
  }
  func.func @transform_2(%arg0: i32, %arg1: i32) -> (i32, i32, i32) {
    %c0_i32 = arith.constant 0 : i32
    %c0_i32_0 = arith.constant 0 : i32
    %c0_i32_1 = arith.constant 0 : i32
    %c0_i32_2 = arith.constant 0 : i32
    return %c0_i32, %c0_i32_0, %c0_i32_1 : i32, i32, i32
  }
  func.func @transform_3(%arg0: i32, %arg1: i32) -> (i32, i32) {
    %c0_i32 = arith.constant 0 : i32
    %c0_i32_0 = arith.constant 0 : i32
    return %arg0, %c0_i32 : i32, i32
  }
}

</mosaic_0001>

<llo_original>
// kernel: tpu_custom_call.1
$region0: #{tpu_custom_call.1}
  #allocation0 [shape = 'u32[]', space=smem, size = 0x4, offset = 0x4, fixed_abs, tag = 'smem constant byte address 0x4 - core index']
  #allocation1 [shape = 'u32[144,128]{1,0:T(1,128)}', space=vmem, size = 0x12000, scoped, tag = 'internal scratch']
  %s0 = inlined_call_operand.hbm [shape: f32[8,128], index: 0, kind: input, shape index: {}]
  %s1 = inlined_call_operand.hbm [shape: bf16[3,128,256], index: 1, kind: input, shape index: {}]
  %s2 = inlined_call_operand.hbm [shape: f32[3,1,256], index: 2, kind: input, shape index: {}]
  %s3 = inlined_call_operand.hbm [shape: f32[8,128], index: 3, kind: output, shape index: {}]
  %s4 = sld [smem:[#allocation0]]
  $region61: #{tpu_custom_call.1} parent=0
    _
  %s6 = ssub.s32 1, %s4
  %s7 = scalar_select 0, %s6, %s4
  $region1: #{tpu_custom_call.1} parent=0
    #allocation2 [shape = 'u8[4096]{0}', space=vmem, size = 0x1000, scoped, tag = 'input window, operand 0, single buffered']
    #allocation3 [shape = 's32[2]{0}', space=sflag, size = 0x8, scoped, tag = 'scoped memory for tpu_custom_call.1']
    #allocation4 [shape = 's32[2]{0}', space=sflag, size = 0x8, scoped, tag = 'scoped memory for tpu_custom_call.1']
    #allocation5 [shape = 'u8[131072]{0}', space=vmem, size = 0x20000, scoped, tag = 'input window, operand 1']
    #allocation6 [shape = 's32[2]{0}', space=sflag, size = 0x8, scoped, tag = 'scoped memory for tpu_custom_call.1']
    #allocation7 [shape = 'u8[3072]{0}', space=vmem, size = 0xc00, scoped, tag = 'input window, operand 2, single buffered']
    #allocation8 [shape = 'u8[4096]{0}', space=vmem, size = 0x1000, scoped, tag = 'output window, operand 0, single buffered']
    %8 = vsyncpa [#allocation3], 0
    %9 = vsyncpa [#allocation6], 0
    %s10 = scalar_lea.sflag [#allocation6], 1
    %11 = vsyncpa %s10, 0
    %12 = vsyncpa [#allocation4], 0
    loop: start=0, step=1, limit=5
    $region2: #{tpu_custom_call.1} parent=1 // loop_pre_header
      _
    $region3: #{tpu_custom_call.1} parent=1 // loop_header
      %s14 = sphi 0, %s18
      %p15 = scmp.ge.s32.totalorder %s14, 5
      %s21 = sphi 0, %s33
      %s22 = sphi 0, %s29
      %s23 = sphi 0, %s21
      %s24 = sphi 0, %s22
      %s25 = sphi 0, %s23
      %s26 = sphi 0, %s24
      %s36 = sphi 0, %s38
      %s39 = sphi 0, %s36
      %s40 = sphi 0, %s39
      %s56 = sphi 0, %s40
      %s62 = sphi 0, %s64
      %s65 = sphi 0, %s62
      %s66 = sphi 0, %s65
      %s82 = sphi 0, %s66
      %s86 = sphi 0, %s86
      %s88 = sphi 0, %s86
      %s89 = sphi 0, %s88
      %s103 = sphi 0, %s89
      %s109 = sphi 0, %s111
      %s112 = sphi 0, %s109
      %s113 = sphi 0, %s112
      %s129 = sphi 0, %s113
    $region4: #{tpu_custom_call.1} parent=1 // loop_header_branch
      %17 = sbr.rel (%p15) target = $region8
    $region5: #{tpu_custom_call.1} parent=1 // loop_body
      %s19 = ssub.s32 %s14, 1
      %s20 = ssub.s32 %s14, 2
      %s27 = sadd.s32 1, %s22
      %p28 = scmp.ge.s32.totalorder %s27, 3
      %s29 = scalar_select %p28, 0, %s27
      %s30 = sadd.s32 1, %s21
      %s31 = scalar_select %p28, %s30, %s21
      %p32 = scmp.ge.s32.totalorder %s31, 1
      %s33 = scalar_select %p32, 0, %s31
      %s34 = ssub.s32 %s21, %s33
      %p35 = scmp.eq.s32.totalorder %s34, 0
      %s37 = sadd.s32 %s36, 1
      %s38 = scalar_select %p35, %s36, %s37
      %p41 = pneg %p35
      %p42 = scmp.eq.s32.totalorder %s14, 2
      %p43 = por %p41, %p42
      %p44 = scmp.ne.s32.totalorder %s36, %s39
      %p45 = scmp.eq.s32.totalorder %s14, 0
      %p46 = por %p44, %p45
      %p47 = scmp.ne.s32.totalorder %s36, %s39
      %p48 = scmp.eq.s32.totalorder %s19, 2
      %p49 = por %p47, %p48
      %p50 = scmp.ne.s32.totalorder %s39, %s40
      %p51 = scmp.eq.s32.totalorder %s19, 0
      %p52 = por %p50, %p51
      %p53 = scmp.ne.s32.totalorder %s39, %s40
      %p54 = scmp.eq.s32.totalorder %s20, 2
      %p55 = por %p53, %p54
      %p57 = scmp.ne.s32.totalorder %s40, %s56
      %p58 = scmp.eq.s32.totalorder %s20, 0
      %p59 = por %p57, %p58
      %s60 = ssub.s32 %s22, %s29
      %p61 = scmp.eq.s32.totalorder %s60, 0
      %s63 = sadd.s32 %s62, 1
      %s64 = scalar_select %p61, %s62, %s63
      %p67 = pneg %p61
      %p68 = scmp.eq.s32.totalorder %s14, 2
      %p69 = por %p67, %p68
      %p70 = scmp.ne.s32.totalorder %s62, %s65
      %p71 = scmp.eq.s32.totalorder %s14, 0
      %p72 = por %p70, %p71
      %p73 = scmp.ne.s32.totalorder %s62, %s65
      %p74 = scmp.eq.s32.totalorder %s19, 2
      %p75 = por %p73, %p74
      %p76 = scmp.ne.s32.totalorder %s65, %s66
      %p77 = scmp.eq.s32.totalorder %s19, 0
      %p78 = por %p76, %p77
      %p79 = scmp.ne.s32.totalorder %s65, %s66
      %p80 = scmp.eq.s32.totalorder %s20, 2
      %p81 = por %p79, %p80
      %p83 = scmp.ne.s32.totalorder %s66, %s82
      %p84 = scmp.eq.s32.totalorder %s20, 0
      %p85 = por %p83, %p84
      %s87 = sadd.s32 %s86, 1
      %p90 = scmp.eq.s32.totalorder %s14, 2
      %p91 = scmp.ne.s32.totalorder %s86, %s88
      %p92 = scmp.eq.s32.totalorder %s14, 0
      %p93 = por %p91, %p92
      %p94 = scmp.ne.s32.totalorder %s86, %s88
      %p95 = scmp.eq.s32.totalorder %s19, 2
      %p96 = por %p94, %p95
      %p97 = scmp.ne.s32.totalorder %s88, %s89
      %p98 = scmp.eq.s32.totalorder %s19, 0
      %p99 = por %p97, %p98
      %p100 = scmp.ne.s32.totalorder %s88, %s89
      %p101 = scmp.eq.s32.totalorder %s20, 2
      %p102 = por %p100, %p101
      %p104 = scmp.ne.s32.totalorder %s89, %s103
      %p105 = scmp.eq.s32.totalorder %s20, 0
      %p106 = por %p104, %p105
      %s107 = ssub.s32 %s21, %s33
      %p108 = scmp.eq.s32.totalorder %s107, 0
      %s110 = sadd.s32 %s109, 1
      %s111 = scalar_select %p108, %s109, %s110
      %p114 = pneg %p108
      %p115 = scmp.eq.s32.totalorder %s14, 2
      %p116 = por %p114, %p115
      %p117 = scmp.ne.s32.totalorder %s109, %s112
      %p118 = scmp.eq.s32.totalorder %s14, 0
      %p119 = por %p117, %p118
      %p120 = scmp.ne.s32.totalorder %s109, %s112
      %p121 = scmp.eq.s32.totalorder %s19, 2
      %p122 = por %p120, %p121
      %p123 = scmp.ne.s32.totalorder %s112, %s113
      %p124 = scmp.eq.s32.totalorder %s19, 0
      %p125 = por %p123, %p124
      %p126 = scmp.ne.s32.totalorder %s112, %s113
      %p127 = scmp.eq.s32.totalorder %s20, 2
      %p128 = por %p126, %p127
      %p130 = scmp.ne.s32.totalorder %s113, %s129
      %p131 = scmp.eq.s32.totalorder %s20, 0
      %p132 = por %p130, %p131
      %p133 = scmp.le.s32.totalorder 1, %s14
      %p134 = scmp.lt.s32.totalorder %s14, 4
      %p135 = pnand %p133, %p134
      %p136 = pneg %p135
      // Predicated region
      $region9: #{tpu_custom_call.1} parent=5 // pred_check
        _
      $region10: #{tpu_custom_call.1} parent=5 // pred_check_branch
        %138 = sbr.rel (%p135) target = $region12
      $region11: #{tpu_custom_call.1} parent=5 // pred_region
        %s139 = ssub.s32 %s14, 1
        // Predicated region
        $region13: #{tpu_custom_call.1} parent=11 // pred_check
          %p140 = pneg %p52
        $region14: #{tpu_custom_call.1} parent=11 // pred_check_branch
          %142 = sbr.rel (%p140) target = $region16
        $region15: #{tpu_custom_call.1} parent=11 // pred_region
          %s144 = ssub.s32 128, 128
          %145 = vsyncadd [#allocation3], %s144
          %s146 = smul.addr %s23, 128
          %s147 = scalar_lea.hbm %s0, %s146
          %s149 = sshll.u32 [#allocation2], 4
          %s150 = int_to_ptr.vmem [resolvable:$true] %s149
          %152 = dma.hbm_to_vmem [thread:$0]  %s147, 128, %s150, [#allocation3]
        $region16: #{tpu_custom_call.1} parent=11 // pred_fallthru
          _
        // Predicated region
        $region17: #{tpu_custom_call.1} parent=11 // pred_check
          %p153 = pneg %p99
        $region18: #{tpu_custom_call.1} parent=11 // pred_check_branch
          %155 = sbr.rel (%p153) target = $region20
        $region19: #{tpu_custom_call.1} parent=11 // pred_region
          %s157 = ssub.s32 96, 96
          %158 = vsyncadd [#allocation6], %s157
          %s159 = sshll.u32 [#allocation7], 4
          %s160 = int_to_ptr.vmem [resolvable:$true] %s159
          %165 = dma.hbm_to_vmem [thread:$0]  %s2, 96, %s160, [#allocation6], 32, 32, 2
        $region20: #{tpu_custom_call.1} parent=11 // pred_fallthru
          _
      $region12: #{tpu_custom_call.1} parent=5 // pred_fallthru
        _
      %p166 = scmp.lt.s32.totalorder %s14, 3
      // Predicated region
      $region21: #{tpu_custom_call.1} parent=5 // pred_check
        %p167 = pneg %p166
      $region22: #{tpu_custom_call.1} parent=5 // pred_check_branch
        %169 = sbr.rel (%p167) target = $region24
      $region23: #{tpu_custom_call.1} parent=5 // pred_region
        // Predicated region
        $region25: #{tpu_custom_call.1} parent=23 // pred_check
          %p170 = pneg %p72
        $region26: #{tpu_custom_call.1} parent=23 // pred_check_branch
          %172 = sbr.rel (%p170) target = $region28
        $region27: #{tpu_custom_call.1} parent=23 // pred_region
          %s173 = sand.u32 %s14, 1
          %s174 = scalar_lea.sflag [#allocation6], %s173
          %s175 = sand.u32 %s62, 1
          %s176 = smul.addr %s175, 128
          %s177 = scalar_lea.vmem [#allocation5], %s176
          %s179 = ssub.s32 2048, 2048
          %180 = vsyncadd %s174, %s179
          %s181 = smul.addr %s22, 32
          %s182 = smul.addr %s181, 64
          %s183 = scalar_lea.hbm %s1, %s182
          %s184 = sshll.u32 %s177, 4
          %s185 = int_to_ptr.vmem [resolvable:$true] %s184
          %190 = dma.hbm_to_vmem [thread:$0]  %s183, 2048, %s185, %s174, 128, 128, 8
        $region28: #{tpu_custom_call.1} parent=23 // pred_fallthru
          _
      $region24: #{tpu_custom_call.1} parent=5 // pred_fallthru
        _
      %p191 = scmp.le.s32.totalorder 1, %s14
      %p192 = scmp.lt.s32.totalorder %s14, 4
      %p193 = pnand %p191, %p192
      %p194 = pneg %p193
      // Predicated region
      $region29: #{tpu_custom_call.1} parent=5 // pred_check
        _
      $region30: #{tpu_custom_call.1} parent=5 // pred_check_branch
        %196 = sbr.rel (%p193) target = $region32
      $region31: #{tpu_custom_call.1} parent=5 // pred_region
        %s197 = ssub.s32 %s14, 1
        // Predicated region
        $region33: #{tpu_custom_call.1} parent=31 // pred_check
          %p198 = pneg %p52
        $region34: #{tpu_custom_call.1} parent=31 // pred_check_branch
          %200 = sbr.rel (%p198) target = $region36
        $region35: #{tpu_custom_call.1} parent=31 // pred_region
          %201 = dma.done [#allocation3], 128
        $region36: #{tpu_custom_call.1} parent=31 // pred_fallthru
          _
        %s202 = sand.u32 %s19, 1
        %s203 = scalar_lea.sflag [#allocation6], %s202
        %s204 = sand.u32 %s65, 1
        %s205 = smul.addr %s204, 128
        %s206 = scalar_lea.vmem [#allocation5], %s205
        // Predicated region
        $region37: #{tpu_custom_call.1} parent=31 // pred_check
          %p207 = pneg %p78
        $region38: #{tpu_custom_call.1} parent=31 // pred_check_branch
          %209 = sbr.rel (%p207) target = $region40
        $region39: #{tpu_custom_call.1} parent=31 // pred_region
          %210 = dma.done %s203, 2048
        $region40: #{tpu_custom_call.1} parent=31 // pred_fallthru
          _
        // Predicated region
        $region41: #{tpu_custom_call.1} parent=31 // pred_check
          %p211 = pneg %p99
        $region42: #{tpu_custom_call.1} parent=31 // pred_check_branch
          %213 = sbr.rel (%p211) target = $region44
        $region43: #{tpu_custom_call.1} parent=31 // pred_region
          %214 = dma.done [#allocation6], 96
        $region44: #{tpu_custom_call.1} parent=31 // pred_fallthru
          _
        %p215 = pneg %p52
        %p216 = pneg %p49
        %s217 = sand.u32 %s19, 1
        %s218 = scalar_lea.sflag [#allocation6], %s217
        %s219 = sand.u32 %s65, 1
        %s220 = smul.addr %s219, 128
        %s221 = scalar_lea.vmem [#allocation5], %s220
        %p222 = pneg %p78
        %p223 = pneg %p75
        %p224 = pneg %p99
        %p225 = pneg %p96
        %p226 = pneg %p125
        %p227 = pneg %p122
        %p229 = scmp.eq.s32.totalorder %s24, 0
        // Predicated region
        $region45: #{tpu_custom_call.1} parent=31 // pred_check
          %p230 = pneg %p229
        $region46: #{tpu_custom_call.1} parent=31 // pred_check_branch
          %232 = sbr.rel (%p230) target = $region48
        $region47: #{tpu_custom_call.1} parent=31 // pred_region
          %v233 = vld [vmem:[#allocation2] sm:$0xff]
          %234 = vst [vmem:[#allocation8] sm:$0xff] %v233
        $region48: #{tpu_custom_call.1} parent=31 // pred_fallthru
          _
        %v235 = vld [vmem:[#allocation8] sm:$0xff]
        %v236 = vpack.c.bf16 %v235, %v235
        %v237 = vld [vmem:[%s206] sm:$0xff]
        %v238 = vld [vmem:[%s206 + $0x8] sm:$0xff]
        %v239 = vld [vmem:[%s206 + $0x10] sm:$0xff]
        %v240 = vld [vmem:[%s206 + $0x18] sm:$0xff]
        %v241 = vld [vmem:[%s206 + $0x20] sm:$0xff]
        %v242 = vld [vmem:[%s206 + $0x28] sm:$0xff]
        %v243 = vld [vmem:[%s206 + $0x30] sm:$0xff]
        %v244 = vld [vmem:[%s206 + $0x38] sm:$0xff]
        %v245 = vld [vmem:[%s206 + $0x40] sm:$0xff]
        %v246 = vld [vmem:[%s206 + $0x48] sm:$0xff]
        %v247 = vld [vmem:[%s206 + $0x50] sm:$0xff]
        %v248 = vld [vmem:[%s206 + $0x58] sm:$0xff]
        %v249 = vld [vmem:[%s206 + $0x60] sm:$0xff]
        %v250 = vld [vmem:[%s206 + $0x68] sm:$0xff]
        %v251 = vld [vmem:[%s206 + $0x70] sm:$0xff]
        %v252 = vld [vmem:[%s206 + $0x78] sm:$0xff]
        %s253 = smul.u32 %s24, 2
        %s254 = scalar_lea.vmem [#allocation7], %s253
        %v255 = vld [vmem:[%s254] sm:$0x3]
        %v257 = vlaneseq
        %v258 = vshrl.u32 %v257, 7
        %v259 = vsub.s32 0, %v258
        %v260 = vrot.slane %v255, %v259
        %v261 = vlaneseq
        %v262 = vshrl.u32 %v261, 7
        %v263 = vsub.s32 1, %v262
        %v264 = vrot.slane %v255, %v263
        %v283 = vunpack.c.l.b16 %v237
        %v284 = vunpack.c.h.b16 %v237
        %v285 = vunpack.c.l.b16 %v238
        %v286 = vunpack.c.h.b16 %v238
        %v287 = vunpack.c.l.b16 %v239
        %v288 = vunpack.c.h.b16 %v239
        %v289 = vunpack.c.l.b16 %v240
        %v290 = vunpack.c.h.b16 %v240
        %v291 = vunpack.c.l.b16 %v241
        %v292 = vunpack.c.h.b16 %v241
        %v293 = vunpack.c.l.b16 %v242
        %v294 = vunpack.c.h.b16 %v242
        %v295 = vunpack.c.l.b16 %v243
        %v296 = vunpack.c.h.b16 %v243
        %v297 = vunpack.c.l.b16 %v244
        %v298 = vunpack.c.h.b16 %v244
        %v299 = vunpack.c.l.b16 %v245
        %v300 = vunpack.c.h.b16 %v245
        %v301 = vunpack.c.l.b16 %v246
        %v302 = vunpack.c.h.b16 %v246
        %v303 = vunpack.c.l.b16 %v247
        %v304 = vunpack.c.h.b16 %v247
        %v305 = vunpack.c.l.b16 %v248
        %v306 = vunpack.c.h.b16 %v248
        %v307 = vunpack.c.l.b16 %v249
        %v308 = vunpack.c.h.b16 %v249
        %v309 = vunpack.c.l.b16 %v250
        %v310 = vunpack.c.h.b16 %v250
        %v311 = vunpack.c.l.b16 %v251
        %v312 = vunpack.c.h.b16 %v251
        %v313 = vunpack.c.l.b16 %v252
        %v314 = vunpack.c.h.b16 %v252
        %v315 = vpack.c.b16 %v285, %v283
        %v316 = vpack.c.b16 %v286, %v284
        %v317 = vpack.c.b16 %v289, %v287
        %v318 = vpack.c.b16 %v290, %v288
        %v319 = vpack.c.b16 %v293, %v291
        %v320 = vpack.c.b16 %v294, %v292
        %v321 = vpack.c.b16 %v297, %v295
        %v322 = vpack.c.b16 %v298, %v296
        %v323 = vpack.c.b16 %v301, %v299
        %v324 = vpack.c.b16 %v302, %v300
        %v325 = vpack.c.b16 %v305, %v303
        %v326 = vpack.c.b16 %v306, %v304
        %v327 = vpack.c.b16 %v309, %v307
        %v328 = vpack.c.b16 %v310, %v308
        %v329 = vpack.c.b16 %v313, %v311
        %v330 = vpack.c.b16 %v314, %v312
        %347 = vmatprep.subr.bf16.mxu0 %v330
        %348 = vmatpush1.bf16.msra.mxu0 %v329
        %349 = vmatprep.subr.bf16.mxu0 %v328
        %350 = vmatpush1.bf16.msra.mxu0 %v327
        %351 = vmatprep.subr.bf16.mxu0 %v326
        %352 = vmatpush1.bf16.msra.mxu0 %v325
        %353 = vmatprep.subr.bf16.mxu0 %v324
        %354 = vmatpush1.bf16.msra.mxu0 %v323
        %355 = vmatprep.subr.bf16.mxu0 %v322
        %356 = vmatpush1.bf16.msra.mxu0 %v321
        %357 = vmatprep.subr.bf16.mxu0 %v320
        %358 = vmatpush1.bf16.msra.mxu0 %v319
        %359 = vmatprep.subr.bf16.mxu0 %v318
        %360 = vmatpush1.bf16.msra.mxu0 %v317
        %361 = vmatprep.subr.bf16.mxu0 %v316
        %362 = vmatpush1.bf16.msra.mxu0 %v315
        %363 = vmatprep.subr.bf16.mxu0 0
        %364 = vmatpush2.bf16.msra.mxu0 0
        %365 = vmatprep.subr.bf16.mxu0 0
        %366 = vmatpush2.bf16.msra.mxu0 0
        %367 = vmatprep.subr.bf16.mxu0 0
        %368 = vmatpush2.bf16.msra.mxu0 0
        %369 = vmatprep.subr.bf16.mxu0 0
        %370 = vmatpush2.bf16.msra.mxu0 0
        %371 = vmatprep.subr.bf16.mxu0 0
        %372 = vmatpush2.bf16.msra.mxu0 0
        %373 = vmatprep.subr.bf16.mxu0 0
        %374 = vmatpush2.bf16.msra.mxu0 0
        %375 = vmatprep.subr.bf16.mxu0 0
        %376 = vmatpush2.bf16.msra.mxu0 0
        %377 = vmatprep.subr.bf16.mxu0 0
        %378 = vmatpush2.bf16.msra.mxu0 0
        %379 = vmatprep.mubr.bf16.mxu0 0
        %380 = vmatmul.mubr.bf16.gmra.mxu0 %v236
        %v381 = vpop.f32.mrf.mxu0
        %v382 = vadd.f32 %v260, %v381
        %v383 = vpop.f32.mrf.mxu0
        %v384 = vadd.f32 %v264, %v383
        %v385 = vpop.f32.mrf.mxu0
        %v386 = vpop.f32.mrf.mxu0
        %387 = vdwg.mxu0
        %v388 = vxor.u32 %v382, 2147483648
        %v389 = vmul.f32 %v388, 1.442695
        %v390 = vpow.pop %v389
        %v391 = vadd.f32 %v390, 1.0
        %v392 = vrcp.pop %v391
        %v393 = vmul.f32 1.0, %v392
        %v394 = vmax.f32 %v384, 0.0
        %v395 = vsub.f32 %v394, %v235
        %v396 = vmul.f32 %v393, %v395
        %v397 = vadd.f32 %v235, %v396
        %398 = vst [vmem:[#allocation8] sm:$0xff] %v397
        // Predicated region
        $region49: #{tpu_custom_call.1} parent=31 // pred_check
          %p399 = pneg %p122
        $region50: #{tpu_custom_call.1} parent=31 // pred_check_branch
          %401 = sbr.rel (%p399) target = $region52
        $region51: #{tpu_custom_call.1} parent=31 // pred_region
          %s403 = ssub.s32 128, 128
          %404 = vsyncadd [#allocation4], %s403
          %s405 = smul.addr %s23, 128
          %s406 = scalar_lea.hbm %s3, %s405
          %s408 = sshll.u32 [#allocation8], 4
          %s409 = int_to_ptr.vmem [resolvable:$true] %s408
          %411 = dma.vmem_to_hbm [thread:$0]  %s409, 128, %s406, [#allocation4]
        $region52: #{tpu_custom_call.1} parent=31 // pred_fallthru
          _
        // Predicated region
        $region53: #{tpu_custom_call.1} parent=31 // pred_check
          %p412 = pneg %p122
        $region54: #{tpu_custom_call.1} parent=31 // pred_check_branch
          %414 = sbr.rel (%p412) target = $region56
        $region55: #{tpu_custom_call.1} parent=31 // pred_region
          %415 = dma.done [#allocation4], 128
        $region56: #{tpu_custom_call.1} parent=31 // pred_fallthru
          _
      $region32: #{tpu_custom_call.1} parent=5 // pred_fallthru
        _
      %p416 = scmp.le.s32.totalorder 2, %s14
      // Predicated region
      $region57: #{tpu_custom_call.1} parent=5 // pred_check
        %p417 = pneg %p416
      $region58: #{tpu_custom_call.1} parent=5 // pred_check_branch
        %419 = sbr.rel (%p417) target = $region60
      $region59: #{tpu_custom_call.1} parent=5 // pred_region
        %s420 = ssub.s32 %s14, 2
      $region60: #{tpu_custom_call.1} parent=5 // pred_fallthru
        _
    $region6: #{tpu_custom_call.1} parent=1 // loop_footer
      %s18 = sadd.s32 1, %s14
    $region7: #{tpu_custom_call.1} parent=1 // loop_footer_branch
      %13 = sbr.rel target = $region3
    $region8: #{tpu_custom_call.1} parent=1 // loop_exit
      _
    %421 = vsyncpa [#allocation3], 1
    %s422 = scalar_lea.sflag [#allocation3], 1
    %423 = vsyncpa %s422, 1
    %424 = vsyncpa [#allocation6], 1
    %s425 = scalar_lea.sflag [#allocation6], 1
    %426 = vsyncpa %s425, 1
    %427 = vsyncpa [#allocation4], 1
    %s428 = scalar_lea.sflag [#allocation4], 1
    %429 = vsyncpa %s428, 1

</llo_original>
